<compile_context>
chip_gen: v7x
topology: tpu7x:2x2x1
jax: 0.10.0
libtpu: 0.0.40
codegen_flags: <defaults>
</compile_context>

<pallas_src>
import functools

import jax
import jax.numpy as jnp
from jax import lax
from jax.experimental import pallas as pl
from jax.experimental.pallas import tpu as pltpu


# ---- packed-slab row layout (all rows 128-wide f32; leading lanes used) ----
ROW_B_SNP = 0   # [:m]   SparseConnected bias
ROW_B_G1  = 1   # [:m]   GCN1 bias
ROW_B_G2  = 2   # [:m]   GCN2 bias
ROW_B_CAT = 3   # [:64]  [b_p1 | b_p2]
ROW_GAMMA = 4   # [:64]  BatchNorm1d gamma
ROW_BETA  = 5   # [:64]  BatchNorm1d beta
ROW_W_LIN = 6   # [:64]  final Linear(64->1) weight, as a row
ROW_MISC  = 7   # [0] = b_lin, [1] = param[0], [2] = param[1]
SLAB_ROWS = 8
SLAB_LANES = 128


def netgp_kernel(datas_ref, transcribe_ref, w_snp_ref, w_g_ref, w_pw_ref,
                 slab_ref, out_ref, *, m, hidden):
    f32 = jnp.float32
    two_h = 2 * hidden

    x = datas_ref[...].astype(f32)        # (B, n_snp)
    t = transcribe_ref[...].astype(f32)   # (B, m)
    slab = slab_ref[...]                  # (8, 128) f32 — one vreg tile

    b_snp = slab[ROW_B_SNP:ROW_B_SNP + 1, :m]
    b_g1  = slab[ROW_B_G1:ROW_B_G1 + 1, :m]
    b_g2  = slab[ROW_B_G2:ROW_B_G2 + 1, :m]
    b_cat = slab[ROW_B_CAT:ROW_B_CAT + 1, :two_h]
    gamma = slab[ROW_GAMMA:ROW_GAMMA + 1, :two_h]
    beta  = slab[ROW_BETA:ROW_BETA + 1, :two_h]
    w_lin = slab[ROW_W_LIN:ROW_W_LIN + 1, :two_h]
    misc  = slab[ROW_MISC:ROW_MISC + 1, :]

    # --- SparseConnectedModule (weights pre-masked in wrapper) + ReLU --------
    snp = jnp.dot(x, w_snp_ref[...], preferred_element_type=f32) + b_snp
    snp = jnp.maximum(snp, 0.0)                                   # (B, m)

    # --- GCN1 / GCN2 (adjacency pre-masked in wrapper) + ReLU ----------------
    g = jnp.dot(t, w_g_ref[0:m, :], preferred_element_type=f32) + b_g1
    g = jnp.maximum(g, 0.0)                                       # (B, m)
    g = jnp.dot(g, w_g_ref[m:2 * m, :], preferred_element_type=f32) + b_g2
    g = jnp.maximum(g, 0.0)                                       # (B, m)

    # --- fused pathway linears: block-diagonal weight, no lane concat --------
    # w_pw rows [0:m]  = [W_p1 | 0], rows [m:2m] = [0 | W_p2]
    z = (jnp.dot(snp, w_pw_ref[0:m, :], preferred_element_type=f32)
         + jnp.dot(g, w_pw_ref[m:2 * m, :], preferred_element_type=f32)
         + b_cat)
    p = jnp.maximum(z, 0.0)                                       # (B, 64) = [p1 | p2]

    # --- learned gates: sigmoid(param), applied via lane select --------------
    gate_row = jax.nn.sigmoid(misc)                               # (1, 128)
    g0 = gate_row[:, 1:2]
    g1 = gate_row[:, 2:3]
    lane = lax.broadcasted_iota(jnp.int32, (1, two_h), 1)
    gate_vec = jnp.where(lane < hidden, g0, g1)                   # (1, 64)
    cat = gate_vec * p                                            # (B, 64)

    # --- BatchNorm1d(64): training-mode batch stats (biased var), eps=1e-5 ---
    mean = jnp.mean(cat, axis=0, keepdims=True)                   # (1, 64)
    var = jnp.mean((cat - mean) ** 2, axis=0, keepdims=True)      # (1, 64)
    bn = (cat - mean) * lax.rsqrt(var + 1e-5) * gamma + beta      # (B, 64)

    # --- final Linear(64->1) + ReLU: VPU multiply + lane reduce --------------
    b_lin = misc[:, 0:1]
    out = jnp.sum(bn * w_lin, axis=1, keepdims=True) + b_lin      # (B, 1)
    out = jnp.maximum(out, 0.0)

    # lane-dense store: broadcast across 128 lanes (unmasked vst);
    # the wrapper slices column 0.
    out_ref[...] = jnp.broadcast_to(out, out_ref.shape)


def _pad_row(v, lanes=SLAB_LANES):
    v = jnp.ravel(v).astype(jnp.float32)
    return jnp.pad(v, (0, lanes - v.shape[0]))[None, :]


@jax.jit
def netgp_forward(datas, transcribe, p):
    B, _ = datas.shape
    m = transcribe.shape[1]
    hidden = p["w_p1"].shape[1]

    # ---- pure layout plumbing (constant per forward; no hot-path compute) ----
    w_snp_m = (p["w_snp"] * p["genes_mask"]).astype(jnp.float32)       # (n_snp, m)
    w_g = jnp.concatenate([p["w_g1"] * p["adj"],
                           p["w_g2"] * p["adj"]], axis=0).astype(jnp.float32)   # (2m, m)
    zeros_h = jnp.zeros((m, hidden), jnp.float32)
    w_pw = jnp.concatenate(
        [jnp.concatenate([p["w_p1"], zeros_h], axis=1),
         jnp.concatenate([zeros_h, p["w_p2"]], axis=1)], axis=0).astype(jnp.float32)  # (2m, 64)

    misc = jnp.concatenate([jnp.ravel(p["b_lin"]), jnp.ravel(p["param"])])
    slab = jnp.concatenate([
        _pad_row(p["b_snp"]),
        _pad_row(p["b_g1"]),
        _pad_row(p["b_g2"]),
        _pad_row(jnp.concatenate([jnp.ravel(p["b_p1"]), jnp.ravel(p["b_p2"])])),
        _pad_row(p["bn_gamma"]),
        _pad_row(p["bn_beta"]),
        _pad_row(p["w_lin"]),       # (64,1) column -> 64-lane row
        _pad_row(misc),
    ], axis=0)                                                          # (8, 128)

    kernel = functools.partial(netgp_kernel, m=m, hidden=hidden)
    out_wide = pl.pallas_call(
        kernel,
        out_shape=jax.ShapeDtypeStruct((B, SLAB_LANES), jnp.float32),
        in_specs=[pl.BlockSpec(memory_space=pltpu.MemorySpace.VMEM)] * 6,
        out_specs=pl.BlockSpec(memory_space=pltpu.MemorySpace.VMEM),
    )(datas, transcribe, w_snp_m, w_g, w_pw, slab)
    return out_wide[:, :1]


def netgp_reference(datas, transcribe, p):
    """Pure-JAX reference of the same forward (for correctness check)."""
    hi = lax.Precision.HIGHEST
    relu = lambda v: jnp.maximum(v, 0.0)
    snp = relu(jnp.dot(datas, p["w_snp"] * p["genes_mask"], precision=hi) + p["b_snp"])
    p1 = relu(jnp.dot(snp, p["w_p1"], precision=hi) + p["b_p1"])
    g = relu(jnp.dot(transcribe, p["w_g1"] * p["adj"], precision=hi) + p["b_g1"])
    g = relu(jnp.dot(g, p["w_g2"] * p["adj"], precision=hi) + p["b_g2"])
    p2 = relu(jnp.dot(g, p["w_p2"], precision=hi) + p["b_p2"])
    gate = jax.nn.sigmoid(p["param"])
    cat = jnp.concatenate([gate[:, 0:1] * p1, gate[:, 1:2] * p2], axis=1)
    mean = jnp.mean(cat, axis=0, keepdims=True)
    var = jnp.mean((cat - mean) ** 2, axis=0, keepdims=True)
    bn = (cat - mean) * lax.rsqrt(var + 1e-5) * p["bn_gamma"] + p["bn_beta"]
    return relu(jnp.dot(bn, p["w_lin"], precision=hi) + p["b_lin"])


def init_params(key, n_snp, m, hidden=32):
    ks = jax.random.split(key, 12)
    u = lambda k, shape, s: jax.random.uniform(k, shape, jnp.float32, -s, s)
    genes_mask = jax.random.bernoulli(ks[0], 0.4, (n_snp, m)).astype(jnp.float32)
    adj = jax.random.bernoulli(ks[1], 0.3, (m, m)).astype(jnp.float32)
    adj = jnp.maximum(adj, jnp.eye(m, dtype=jnp.float32))  # self-loops
    return {
        "genes_mask": genes_mask,
        "w_snp": u(ks[2], (n_snp, m), 1.0 / jnp.sqrt(n_snp)),
        "b_snp": u(ks[3], (1, m), 1.0 / jnp.sqrt(n_snp)),
        "adj": adj,
        "w_g1": u(ks[4], (m, m), 1.0 / jnp.sqrt(m)),
        "b_g1": jnp.zeros((1, m), jnp.float32),
        "w_g2": u(ks[5], (m, m), 1.0 / jnp.sqrt(m)),
        "b_g2": jnp.zeros((1, m), jnp.float32),
        "w_p1": u(ks[6], (m, hidden), 1.0 / jnp.sqrt(m)),
        "b_p1": u(ks[7], (1, hidden), 1.0 / jnp.sqrt(m)),
        "w_p2": u(ks[8], (m, hidden), 1.0 / jnp.sqrt(m)),
        "b_p2": u(ks[9], (1, hidden), 1.0 / jnp.sqrt(m)),
        "bn_gamma": jnp.ones((1, 2 * hidden), jnp.float32),
        "bn_beta": jnp.zeros((1, 2 * hidden), jnp.float32),
        "w_lin": u(ks[10], (2 * hidden, 1), 1.0 / jnp.sqrt(2 * hidden)),
        "b_lin": u(ks[11], (1, 1), 1.0 / jnp.sqrt(2 * hidden)),
        "param": jnp.array([[0.8, 0.2]], jnp.float32),
    }


if __name__ == "__main__":
    B, n_snp, m = 8, 16, 8   # batch, #SNPs, #genes (= len(gene_re_mask))
    key = jax.random.PRNGKey(0)
    k_data, k_trans, k_param = jax.random.split(key, 3)

    datas = jax.random.uniform(k_data, (B, n_snp), jnp.float32)      # SNP dosages
    transcribe = jax.random.uniform(k_trans, (B, m), jnp.float32)    # transcription levels
    params = init_params(k_param, n_snp, m)

    out = jax.block_until_ready(netgp_forward(datas, transcribe, params))
    assert out.shape == (B, 1) and out.dtype == jnp.float32

    ref = jax.block_until_ready(netgp_reference(datas, transcribe, params))
    assert jnp.allclose(out, ref, atol=1e-2, rtol=1e-2), (out, ref)

    print("KERNEL_OK")
</pallas_src>

<mosaic_0001>
module attributes {stable_mosaic.version = 11 : i64} {
  func.func @netgp_kernel(%arg0: memref<8x16xf32, #tpu.memory_space<vmem>>, %arg1: memref<8x8xf32, #tpu.memory_space<vmem>>, %arg2: memref<16x8xf32, #tpu.memory_space<vmem>>, %arg3: memref<16x8xf32, #tpu.memory_space<vmem>>, %arg4: memref<16x64xf32, #tpu.memory_space<vmem>>, %arg5: memref<8x128xf32, #tpu.memory_space<vmem>>, %arg6: memref<8x128xf32, #tpu.memory_space<vmem>>) attributes {dimension_semantics = [], scalar_prefetch = 0 : i64, scratch_operands = 0 : i64, tpu.core_type = #tpu.core_type<tc>} {
    %c0 = arith.constant 0 : index
    %c0_0 = arith.constant 0 : index
    %0 = vector.load %arg0[%c0, %c0_0] : memref<8x16xf32, #tpu.memory_space<vmem>>, vector<8x16xf32>
    %c0_1 = arith.constant 0 : index
    %c0_2 = arith.constant 0 : index
    %1 = vector.load %arg1[%c0_1, %c0_2] : memref<8x8xf32, #tpu.memory_space<vmem>>, vector<8x8xf32>
    %c0_3 = arith.constant 0 : index
    %c0_4 = arith.constant 0 : index
    %2 = vector.load %arg5[%c0_3, %c0_4] : memref<8x128xf32, #tpu.memory_space<vmem>>, vector<8x128xf32>
    %3 = vector.extract_strided_slice %2 {offsets = [0, 0], sizes = [1, 8], strides = [1, 1]} : vector<8x128xf32> to vector<1x8xf32>
    %4 = vector.extract_strided_slice %2 {offsets = [1, 0], sizes = [1, 8], strides = [1, 1]} : vector<8x128xf32> to vector<1x8xf32>
    %5 = vector.extract_strided_slice %2 {offsets = [2, 0], sizes = [1, 8], strides = [1, 1]} : vector<8x128xf32> to vector<1x8xf32>
    %6 = vector.extract_strided_slice %2 {offsets = [3, 0], sizes = [1, 64], strides = [1, 1]} : vector<8x128xf32> to vector<1x64xf32>
    %7 = vector.extract_strided_slice %2 {offsets = [4, 0], sizes = [1, 64], strides = [1, 1]} : vector<8x128xf32> to vector<1x64xf32>
    %8 = vector.extract_strided_slice %2 {offsets = [5, 0], sizes = [1, 64], strides = [1, 1]} : vector<8x128xf32> to vector<1x64xf32>
    %9 = vector.extract_strided_slice %2 {offsets = [6, 0], sizes = [1, 64], strides = [1, 1]} : vector<8x128xf32> to vector<1x64xf32>
    %10 = vector.extract_strided_slice %2 {offsets = [7, 0], sizes = [1, 128], strides = [1, 1]} : vector<8x128xf32> to vector<1x128xf32>
    %c0_5 = arith.constant 0 : index
    %c0_6 = arith.constant 0 : index
    %11 = vector.load %arg2[%c0_5, %c0_6] : memref<16x8xf32, #tpu.memory_space<vmem>>, vector<16x8xf32>
    %cst = arith.constant dense<0.000000e+00> : vector<8x8xf32>
    %12 = tpu.matmul %0, %11, %cst {dimension_numbers = #tpu.dot_dimension_numbers<[1], [0], [0], [1], [0, 0, 1, 1], [], []>} : vector<8x16xf32>, vector<16x8xf32>, vector<8x8xf32> -> vector<8x8xf32>
    %13 = vector.broadcast %3 : vector<1x8xf32> to vector<8x8xf32>
    %14 = arith.addf %12, %13 : vector<8x8xf32>
    %cst_7 = arith.constant 0.000000e+00 : f32
    %15 = vector.broadcast %cst_7 : f32 to vector<8x8xf32>
    %16 = arith.maximumf %14, %15 : vector<8x8xf32>
    %c0_8 = arith.constant 0 : index
    %c0_9 = arith.constant 0 : index
    %17 = vector.load %arg3[%c0_8, %c0_9] : memref<16x8xf32, #tpu.memory_space<vmem>>, vector<8x8xf32>
    %cst_10 = arith.constant dense<0.000000e+00> : vector<8x8xf32>
    %18 = tpu.matmul %1, %17, %cst_10 {dimension_numbers = #tpu.dot_dimension_numbers<[1], [0], [0], [1], [0, 0, 1, 1], [], []>} : vector<8x8xf32>, vector<8x8xf32>, vector<8x8xf32> -> vector<8x8xf32>
    %19 = vector.broadcast %4 : vector<1x8xf32> to vector<8x8xf32>
    %20 = arith.addf %18, %19 : vector<8x8xf32>
    %cst_11 = arith.constant 0.000000e+00 : f32
    %21 = vector.broadcast %cst_11 : f32 to vector<8x8xf32>
    %22 = arith.maximumf %20, %21 : vector<8x8xf32>
    %c8 = arith.constant 8 : index
    %c0_12 = arith.constant 0 : index
    %23 = vector.load %arg3[%c8, %c0_12] : memref<16x8xf32, #tpu.memory_space<vmem>>, vector<8x8xf32>
    %cst_13 = arith.constant dense<0.000000e+00> : vector<8x8xf32>
    %24 = tpu.matmul %22, %23, %cst_13 {dimension_numbers = #tpu.dot_dimension_numbers<[1], [0], [0], [1], [0, 0, 1, 1], [], []>} : vector<8x8xf32>, vector<8x8xf32>, vector<8x8xf32> -> vector<8x8xf32>
    %25 = vector.broadcast %5 : vector<1x8xf32> to vector<8x8xf32>
    %26 = arith.addf %24, %25 : vector<8x8xf32>
    %cst_14 = arith.constant 0.000000e+00 : f32
    %27 = vector.broadcast %cst_14 : f32 to vector<8x8xf32>
    %28 = arith.maximumf %26, %27 : vector<8x8xf32>
    %c0_15 = arith.constant 0 : index
    %c0_16 = arith.constant 0 : index
    %29 = vector.load %arg4[%c0_15, %c0_16] : memref<16x64xf32, #tpu.memory_space<vmem>>, vector<8x64xf32>
    %cst_17 = arith.constant dense<0.000000e+00> : vector<8x64xf32>
    %30 = tpu.matmul %16, %29, %cst_17 {dimension_numbers = #tpu.dot_dimension_numbers<[1], [0], [0], [1], [0, 0, 1, 1], [], []>} : vector<8x8xf32>, vector<8x64xf32>, vector<8x64xf32> -> vector<8x64xf32>
    %c8_18 = arith.constant 8 : index
    %c0_19 = arith.constant 0 : index
    %31 = vector.load %arg4[%c8_18, %c0_19] : memref<16x64xf32, #tpu.memory_space<vmem>>, vector<8x64xf32>
    %cst_20 = arith.constant dense<0.000000e+00> : vector<8x64xf32>
    %32 = tpu.matmul %28, %31, %cst_20 {dimension_numbers = #tpu.dot_dimension_numbers<[1], [0], [0], [1], [0, 0, 1, 1], [], []>} : vector<8x8xf32>, vector<8x64xf32>, vector<8x64xf32> -> vector<8x64xf32>
    %33 = arith.addf %30, %32 : vector<8x64xf32>
    %34 = vector.broadcast %6 : vector<1x64xf32> to vector<8x64xf32>
    %35 = arith.addf %33, %34 : vector<8x64xf32>
    %cst_21 = arith.constant 0.000000e+00 : f32
    %36 = vector.broadcast %cst_21 : f32 to vector<8x64xf32>
    %37 = arith.maximumf %35, %36 : vector<8x64xf32>
    %38 = arith.negf %10 : vector<1x128xf32>
    %39 = math.exp %38 : vector<1x128xf32>
    %cst_22 = arith.constant 1.000000e+00 : f32
    %40 = vector.broadcast %cst_22 : f32 to vector<1x128xf32>
    %41 = arith.addf %40, %39 : vector<1x128xf32>
    %42 = arith.divf %40, %41 : vector<1x128xf32>
    %43 = vector.extract_strided_slice %42 {offsets = [0, 1], sizes = [1, 1], strides = [1, 1]} : vector<1x128xf32> to vector<1x1xf32>
    %44 = vector.extract_strided_slice %42 {offsets = [0, 2], sizes = [1, 1], strides = [1, 1]} : vector<1x128xf32> to vector<1x1xf32>
    %45 = tpu.iota {dimensions = array<i32: 1>} : vector<1x64xi32>
    %c32_i32 = arith.constant 32 : i32
    %46 = vector.broadcast %c32_i32 : i32 to vector<1x64xi32>
    %47 = arith.cmpi slt, %45, %46 : vector<1x64xi32>
    %48 = vector.shape_cast %43 : vector<1x1xf32> to vector<1x1xf32>
    %49 = vector.broadcast %48 : vector<1x1xf32> to vector<1x64xf32>
    %50 = vector.shape_cast %44 : vector<1x1xf32> to vector<1x1xf32>
    %51 = vector.broadcast %50 : vector<1x1xf32> to vector<1x64xf32>
    %52 = arith.select %47, %49, %51 : vector<1x64xi1>, vector<1x64xf32>
    %53 = vector.broadcast %52 : vector<1x64xf32> to vector<8x64xf32>
    %54 = arith.mulf %53, %37 : vector<8x64xf32>
    %cst_23 = arith.constant dense<0.000000e+00> : vector<64xf32>
    %55 = vector.multi_reduction <add>, %54, %cst_23 [0] : vector<8x64xf32> to vector<64xf32>
    %56 = vector.shape_cast %55 : vector<64xf32> to vector<1x64xf32>
    %cst_24 = arith.constant 8.000000e+00 : f32
    %57 = vector.broadcast %cst_24 : f32 to vector<1x64xf32>
    %58 = arith.divf %56, %57 : vector<1x64xf32>
    %59 = vector.broadcast %58 : vector<1x64xf32> to vector<8x64xf32>
    %60 = arith.subf %54, %59 : vector<8x64xf32>
    %61 = arith.mulf %60, %60 : vector<8x64xf32>
    %cst_25 = arith.constant dense<0.000000e+00> : vector<64xf32>
    %62 = vector.multi_reduction <add>, %61, %cst_25 [0] : vector<8x64xf32> to vector<64xf32>
    %63 = vector.shape_cast %62 : vector<64xf32> to vector<1x64xf32>
    %cst_26 = arith.constant 8.000000e+00 : f32
    %64 = vector.broadcast %cst_26 : f32 to vector<1x64xf32>
    %65 = arith.divf %63, %64 : vector<1x64xf32>
    %66 = vector.broadcast %58 : vector<1x64xf32> to vector<8x64xf32>
    %67 = arith.subf %54, %66 : vector<8x64xf32>
    %cst_27 = arith.constant 9.99999974E-6 : f32
    %68 = vector.broadcast %cst_27 : f32 to vector<1x64xf32>
    %69 = arith.addf %65, %68 : vector<1x64xf32>
    %70 = math.rsqrt %69 : vector<1x64xf32>
    %71 = vector.broadcast %70 : vector<1x64xf32> to vector<8x64xf32>
    %72 = arith.mulf %67, %71 : vector<8x64xf32>
    %73 = vector.broadcast %7 : vector<1x64xf32> to vector<8x64xf32>
    %74 = arith.mulf %72, %73 : vector<8x64xf32>
    %75 = vector.broadcast %8 : vector<1x64xf32> to vector<8x64xf32>
    %76 = arith.addf %74, %75 : vector<8x64xf32>
    %77 = vector.extract_strided_slice %10 {offsets = [0, 0], sizes = [1, 1], strides = [1, 1]} : vector<1x128xf32> to vector<1x1xf32>
    %78 = vector.broadcast %9 : vector<1x64xf32> to vector<8x64xf32>
    %79 = arith.mulf %76, %78 : vector<8x64xf32>
    %cst_28 = arith.constant dense<0.000000e+00> : vector<8xf32>
    %80 = vector.multi_reduction <add>, %79, %cst_28 [1] : vector<8x64xf32> to vector<8xf32>
    %81 = vector.shape_cast %80 : vector<8xf32> to vector<8x1xf32>
    %82 = vector.broadcast %77 : vector<1x1xf32> to vector<8x1xf32>
    %83 = arith.addf %81, %82 : vector<8x1xf32>
    %cst_29 = arith.constant 0.000000e+00 : f32
    %84 = vector.broadcast %cst_29 : f32 to vector<8x1xf32>
    %85 = arith.maximumf %83, %84 : vector<8x1xf32>
    %86 = vector.shape_cast %85 : vector<8x1xf32> to vector<8x1xf32>
    %87 = vector.broadcast %86 : vector<8x1xf32> to vector<8x128xf32>
    %c0_30 = arith.constant 0 : index
    %c0_31 = arith.constant 0 : index
    %88 = vector.load %arg6[%c0_30, %c0_31] : memref<8x128xf32, #tpu.memory_space<vmem>>, vector<8x128xf32>
    tpu.vector_store %arg6[%c0_30, %c0_31], %87 {strides = array<i32>} : memref<8x128xf32, #tpu.memory_space<vmem>>, vector<8x128xf32>,
    return
  }
}

</mosaic_0001>

<llo_original>
// kernel: mul.3
$region0: #{mul.3}
  #allocation0 [shape = 's32[1]{0}', space=sflag, size = 0x4, scoped, tag = 'scoped memory for mul.3']
  %s0 = inlined_call_operand.vmem [shape: f32[16,8], index: 0, kind: input, shape index: {}]
  %s1 = inlined_call_operand.vmem [shape: f32[16,8], index: 1, kind: input, shape index: {}]
  %s2 = inlined_call_operand.vmem [shape: f32[16,8], index: 2, kind: output, shape index: {}]
  %v3 = vld [vmem:[%s0] sm:$0xff]
  %v4 = vld [vmem:[%s1] sm:$0xff]
  %5 = xla_tuple %v3, %v4
  %6 = xla_tuple %5
  %v7 = vmul.f32 %v3, %v4
  %8 = xla_tuple %v7
  %9 = vst [vmem:[%s2] sm:$0xff] %v7

// kernel: netgp_forward.1
$region0: #{netgp_forward.1}
  #allocation0 [shape = 'u32[]', space=smem, size = 0x4, offset = 0x4, fixed_abs, tag = 'smem constant byte address 0x4 - core index']
  #allocation1 [shape = 'u32[144,128]{1,0:T(1,128)}', space=vmem, size = 0x12000, scoped, tag = 'internal scratch']
  %s0 = inlined_call_operand.vmem [shape: f32[8,16], index: 0, kind: input, shape index: {}]
  %s1 = inlined_call_operand.vmem [shape: f32[8,8], index: 1, kind: input, shape index: {}]
  %s2 = inlined_call_operand.vmem [shape: f32[16,8], index: 2, kind: input, shape index: {}]
  %s3 = inlined_call_operand.vmem [shape: f32[16,8], index: 3, kind: input, shape index: {}]
  %s4 = inlined_call_operand.vmem [shape: f32[16,64], index: 4, kind: input, shape index: {}]
  %s5 = inlined_call_operand.vmem [shape: f32[8,128], index: 5, kind: input, shape index: {}]
  %s6 = inlined_call_operand.vmem [shape: f32[8,128], index: 6, kind: output, shape index: {}]
  %s7 = sld [smem:[#allocation0]]
  $region34: #{netgp_forward.1} parent=0
    _
  %s9 = ssub.s32 1, %s7
  %s10 = scalar_select 0, %s9, %s7
  // Predicated region
  $region2: #{netgp_forward.1} parent=0 // pred_check
    _
  $region3: #{netgp_forward.1} parent=0 // pred_check_branch
    %12 = sbr.rel (0) target = $region5
  $region4: #{netgp_forward.1} parent=0 // pred_region
    _
  $region5: #{netgp_forward.1} parent=0 // pred_fallthru
    _
  // Predicated region
  $region6: #{netgp_forward.1} parent=0 // pred_check
    _
  $region7: #{netgp_forward.1} parent=0 // pred_check_branch
    %14 = sbr.rel (0) target = $region9
  $region8: #{netgp_forward.1} parent=0 // pred_region
    _
  $region9: #{netgp_forward.1} parent=0 // pred_fallthru
    _
  // Predicated region
  $region10: #{netgp_forward.1} parent=0 // pred_check
    _
  $region11: #{netgp_forward.1} parent=0 // pred_check_branch
    %16 = sbr.rel (0) target = $region13
  $region12: #{netgp_forward.1} parent=0 // pred_region
    _
  $region13: #{netgp_forward.1} parent=0 // pred_fallthru
    _
  // Predicated region
  $region14: #{netgp_forward.1} parent=0 // pred_check
    _
  $region15: #{netgp_forward.1} parent=0 // pred_check_branch
    %18 = sbr.rel (0) target = $region17
  $region16: #{netgp_forward.1} parent=0 // pred_region
    _
  $region17: #{netgp_forward.1} parent=0 // pred_fallthru
    _
  // Predicated region
  $region18: #{netgp_forward.1} parent=0 // pred_check
    _
  $region19: #{netgp_forward.1} parent=0 // pred_check_branch
    %20 = sbr.rel (0) target = $region21
  $region20: #{netgp_forward.1} parent=0 // pred_region
    _
  $region21: #{netgp_forward.1} parent=0 // pred_fallthru
    _
  // Predicated region
  $region22: #{netgp_forward.1} parent=0 // pred_check
    _
  $region23: #{netgp_forward.1} parent=0 // pred_check_branch
    %22 = sbr.rel (0) target = $region25
  $region24: #{netgp_forward.1} parent=0 // pred_region
    _
  $region25: #{netgp_forward.1} parent=0 // pred_fallthru
    _
  %v23 = vld [vmem:[%s0] sm:$0xff]
  %v24 = vld [vmem:[%s1] sm:$0xff]
  %v25 = vld [vmem:[%s5] sm:$0xff]
  %v26 = vld [vmem:[%s2] sm:$0xff]
  %v27 = vld [vmem:[%s2 + $0x8] sm:$0xff]
  %v28 = vlaneseq
  %v29 = vshrl.u32 %v28, 7
  %v30 = vsub.s32 0, %v29
  %v31 = vrot.slane %v25, %v30
  %vm32 = vcmask 130048
  %v34 = vsel %vm32, %v23, 0
  %36 = vmatprep.subr.mxu0 0.0
  %37 = vmatpush1.msra.mxu0 %v26
  %38 = vmatprep.subr.mxu0 0.0
  %39 = vmatpush1.msra.mxu0 %v27
  %40 = vmatprep.subr.mxu0 0.0
  %41 = vmatpush1.msra.mxu0 0.0
  %42 = vmatprep.subr.mxu0 0.0
  %43 = vmatpush1.msra.mxu0 0.0
  %44 = vmatprep.subr.mxu0 0.0
  %45 = vmatpush1.msra.mxu0 0.0
  %46 = vmatprep.subr.mxu0 0.0
  %47 = vmatpush1.msra.mxu0 0.0
  %48 = vmatprep.subr.mxu0 0.0
  %49 = vmatpush1.msra.mxu0 0.0
  %50 = vmatprep.subr.mxu0 0.0
  %51 = vmatpush1.msra.mxu0 0.0
  %52 = vmatprep.subr.mxu0 0.0
  %53 = vmatpush1.msra.mxu0 0.0
  %54 = vmatprep.subr.mxu0 0.0
  %55 = vmatpush1.msra.mxu0 0.0
  %56 = vmatprep.subr.mxu0 0.0
  %57 = vmatpush1.msra.mxu0 0.0
  %58 = vmatprep.subr.mxu0 0.0
  %59 = vmatpush1.msra.mxu0 0.0
  %60 = vmatprep.subr.mxu0 0.0
  %61 = vmatpush1.msra.mxu0 0.0
  %62 = vmatprep.subr.mxu0 0.0
  %63 = vmatpush1.msra.mxu0 0.0
  %64 = vmatprep.subr.mxu0 0.0
  %65 = vmatpush1.msra.mxu0 0.0
  %66 = vmatprep.subr.mxu0 0.0
  %67 = vmatpush1.msra.mxu0 0.0
  %68 = vmatprep.subr.mxu0 0.0
  %69 = vmatpush1.msra.mxu0 0.0
  %70 = vmatprep.subr.mxu0 0.0
  %71 = vmatpush1.msra.mxu0 0.0
  %72 = vmatprep.subr.mxu0 0.0
  %73 = vmatpush1.msra.mxu0 0.0
  %74 = vmatprep.subr.mxu0 0.0
  %75 = vmatpush1.msra.mxu0 0.0
  %76 = vmatprep.subr.mxu0 0.0
  %77 = vmatpush1.msra.mxu0 0.0
  %78 = vmatprep.subr.mxu0 0.0
  %79 = vmatpush1.msra.mxu0 0.0
  %80 = vmatprep.subr.mxu0 0.0
  %81 = vmatpush1.msra.mxu0 0.0
  %82 = vmatprep.subr.mxu0 0.0
  %83 = vmatpush1.msra.mxu0 0.0
  %84 = vmatprep.subr.mxu0 0.0
  %85 = vmatpush1.msra.mxu0 0.0
  %86 = vmatprep.subr.mxu0 0.0
  %87 = vmatpush1.msra.mxu0 0.0
  %88 = vmatprep.subr.mxu0 0.0
  %89 = vmatpush1.msra.mxu0 0.0
  %90 = vmatprep.subr.mxu0 0.0
  %91 = vmatpush1.msra.mxu0 0.0
  %92 = vmatprep.subr.mxu0 0.0
  %93 = vmatpush1.msra.mxu0 0.0
  %94 = vmatprep.subr.mxu0 0.0
  %95 = vmatpush1.msra.mxu0 0.0
  %96 = vmatprep.subr.mxu0 0.0
  %97 = vmatpush1.msra.mxu0 0.0
  %98 = vmatprep.subr.mxu0 0.0
  %99 = vmatpush1.msra.mxu0 0.0
  %100 = vmatprep.mubr.f32.mxu0 0.0
  %101 = vmatmul.mubr.f32.gmra.mrb[0].mxu0 %v34
  %v102 = vpop.f32.mrb[0].mxu0
  %v103 = vadd.f32 %v31, %v102
  %v104 = vpop.f32.mrb[0].mxu0
  %105 = vdwg.mxu0
  %v106 = vmax.f32 %v103, 0.0
  %v107 = vld [vmem:[%s3] sm:$0xff]
  %v108 = vlaneseq
  %v109 = vshrl.u32 %v108, 7
  %v110 = vsub.s32 1, %v109
  %v111 = vrot.slane %v25, %v110
  %vm112 = vcmask 64512
  %v114 = vsel %vm112, %v24, 0
  %116 = vmatprep.subr.mxu0 0.0
  %117 = vmatpush1.msra.mxu0 %v107
  %118 = vmatprep.subr.mxu0 0.0
  %119 = vmatpush1.msra.mxu0 0.0
  %120 = vmatprep.subr.mxu0 0.0
  %121 = vmatpush1.msra.mxu0 0.0
  %122 = vmatprep.subr.mxu0 0.0
  %123 = vmatpush1.msra.mxu0 0.0
  %124 = vmatprep.subr.mxu0 0.0
  %125 = vmatpush1.msra.mxu0 0.0
  %126 = vmatprep.subr.mxu0 0.0
  %127 = vmatpush1.msra.mxu0 0.0
  %128 = vmatprep.subr.mxu0 0.0
  %129 = vmatpush1.msra.mxu0 0.0
  %130 = vmatprep.subr.mxu0 0.0
  %131 = vmatpush1.msra.mxu0 0.0
  %132 = vmatprep.subr.mxu0 0.0
  %133 = vmatpush1.msra.mxu0 0.0
  %134 = vmatprep.subr.mxu0 0.0
  %135 = vmatpush1.msra.mxu0 0.0
  %136 = vmatprep.subr.mxu0 0.0
  %137 = vmatpush1.msra.mxu0 0.0
  %138 = vmatprep.subr.mxu0 0.0
  %139 = vmatpush1.msra.mxu0 0.0
  %140 = vmatprep.subr.mxu0 0.0
  %141 = vmatpush1.msra.mxu0 0.0
  %142 = vmatprep.subr.mxu0 0.0
  %143 = vmatpush1.msra.mxu0 0.0
  %144 = vmatprep.subr.mxu0 0.0
  %145 = vmatpush1.msra.mxu0 0.0
  %146 = vmatprep.subr.mxu0 0.0
  %147 = vmatpush1.msra.mxu0 0.0
  %148 = vmatprep.subr.mxu0 0.0
  %149 = vmatpush1.msra.mxu0 0.0
  %150 = vmatprep.subr.mxu0 0.0
  %151 = vmatpush1.msra.mxu0 0.0
  %152 = vmatprep.subr.mxu0 0.0
  %153 = vmatpush1.msra.mxu0 0.0
  %154 = vmatprep.subr.mxu0 0.0
  %155 = vmatpush1.msra.mxu0 0.0
  %156 = vmatprep.subr.mxu0 0.0
  %157 = vmatpush1.msra.mxu0 0.0
  %158 = vmatprep.subr.mxu0 0.0
  %159 = vmatpush1.msra.mxu0 0.0
  %160 = vmatprep.subr.mxu0 0.0
  %161 = vmatpush1.msra.mxu0 0.0
  %162 = vmatprep.subr.mxu0 0.0
  %163 = vmatpush1.msra.mxu0 0.0
  %164 = vmatprep.subr.mxu0 0.0
  %165 = vmatpush1.msra.mxu0 0.0
  %166 = vmatprep.subr.mxu0 0.0
  %167 = vmatpush1.msra.mxu0 0.0
  %168 = vmatprep.subr.mxu0 0.0
  %169 = vmatpush1.msra.mxu0 0.0
  %170 = vmatprep.subr.mxu0 0.0
  %171 = vmatpush1.msra.mxu0 0.0
  %172 = vmatprep.subr.mxu0 0.0
  %173 = vmatpush1.msra.mxu0 0.0
  %174 = vmatprep.subr.mxu0 0.0
  %175 = vmatpush1.msra.mxu0 0.0
  %176 = vmatprep.subr.mxu0 0.0
  %177 = vmatpush1.msra.mxu0 0.0
  %178 = vmatprep.subr.mxu0 0.0
  %179 = vmatpush1.msra.mxu0 0.0
  %180 = vmatprep.mubr.f32.mxu0 0.0
  %181 = vmatmul.mubr.f32.gmra.mrb[0].mxu0 %v114
  %v182 = vpop.f32.mrb[0].mxu0
  %v183 = vadd.f32 %v111, %v182
  %v184 = vpop.f32.mrb[0].mxu0
  %185 = vdwg.mxu0
  %v186 = vmax.f32 %v183, 0.0
  %v187 = vld [vmem:[%s3 + $0x8] sm:$0xff]
  %v188 = vlaneseq
  %v189 = vshrl.u32 %v188, 7
  %v190 = vsub.s32 2, %v189
  %v191 = vrot.slane %v25, %v190
  %v193 = vsel %vm112, %v186, 0
  %195 = vmatprep.subr.mxu0 0.0
  %196 = vmatpush1.msra.mxu0 %v187
  %197 = vmatprep.subr.mxu0 0.0
  %198 = vmatpush1.msra.mxu0 0.0
  %199 = vmatprep.subr.mxu0 0.0
  %200 = vmatpush1.msra.mxu0 0.0
  %201 = vmatprep.subr.mxu0 0.0
  %202 = vmatpush1.msra.mxu0 0.0
  %203 = vmatprep.subr.mxu0 0.0
  %204 = vmatpush1.msra.mxu0 0.0
  %205 = vmatprep.subr.mxu0 0.0
  %206 = vmatpush1.msra.mxu0 0.0
  %207 = vmatprep.subr.mxu0 0.0
  %208 = vmatpush1.msra.mxu0 0.0
  %209 = vmatprep.subr.mxu0 0.0
  %210 = vmatpush1.msra.mxu0 0.0
  %211 = vmatprep.subr.mxu0 0.0
  %212 = vmatpush1.msra.mxu0 0.0
  %213 = vmatprep.subr.mxu0 0.0
  %214 = vmatpush1.msra.mxu0 0.0
  %215 = vmatprep.subr.mxu0 0.0
  %216 = vmatpush1.msra.mxu0 0.0
  %217 = vmatprep.subr.mxu0 0.0
  %218 = vmatpush1.msra.mxu0 0.0
  %219 = vmatprep.subr.mxu0 0.0
  %220 = vmatpush1.msra.mxu0 0.0
  %221 = vmatprep.subr.mxu0 0.0
  %222 = vmatpush1.msra.mxu0 0.0
  %223 = vmatprep.subr.mxu0 0.0
  %224 = vmatpush1.msra.mxu0 0.0
  %225 = vmatprep.subr.mxu0 0.0
  %226 = vmatpush1.msra.mxu0 0.0
  %227 = vmatprep.subr.mxu0 0.0
  %228 = vmatpush1.msra.mxu0 0.0
  %229 = vmatprep.subr.mxu0 0.0
  %230 = vmatpush1.msra.mxu0 0.0
  %231 = vmatprep.subr.mxu0 0.0
  %232 = vmatpush1.msra.mxu0 0.0
  %233 = vmatprep.subr.mxu0 0.0
  %234 = vmatpush1.msra.mxu0 0.0
  %235 = vmatprep.subr.mxu0 0.0
  %236 = vmatpush1.msra.mxu0 0.0
  %237 = vmatprep.subr.mxu0 0.0
  %238 = vmatpush1.msra.mxu0 0.0
  %239 = vmatprep.subr.mxu0 0.0
  %240 = vmatpush1.msra.mxu0 0.0
  %241 = vmatprep.subr.mxu0 0.0
  %242 = vmatpush1.msra.mxu0 0.0
  %243 = vmatprep.subr.mxu0 0.0
  %244 = vmatpush1.msra.mxu0 0.0
  %245 = vmatprep.subr.mxu0 0.0
  %246 = vmatpush1.msra.mxu0 0.0
  %247 = vmatprep.subr.mxu0 0.0
  %248 = vmatpush1.msra.mxu0 0.0
  %249 = vmatprep.subr.mxu0 0.0
  %250 = vmatpush1.msra.mxu0 0.0
  %251 = vmatprep.subr.mxu0 0.0
  %252 = vmatpush1.msra.mxu0 0.0
  %253 = vmatprep.subr.mxu0 0.0
  %254 = vmatpush1.msra.mxu0 0.0
  %255 = vmatprep.subr.mxu0 0.0
  %256 = vmatpush1.msra.mxu0 0.0
  %257 = vmatprep.subr.mxu0 0.0
  %258 = vmatpush1.msra.mxu0 0.0
  %259 = vmatprep.mubr.f32.mxu0 0.0
  %260 = vmatmul.mubr.f32.gmra.mrb[0].mxu0 %v193
  %v261 = vpop.f32.mrb[0].mxu0
  %v262 = vadd.f32 %v191, %v261
  %v263 = vpop.f32.mrb[0].mxu0
  %264 = vdwg.mxu0
  %v265 = vmax.f32 %v262, 0.0
  %v266 = vld [vmem:[%s4] sm:$0xff]
  %v267 = vld [vmem:[%s4 + $0x8] sm:$0xff]
  %v269 = vsel %vm112, %v265, 0
  %271 = vmatprep.subr.mxu0 0.0
  %272 = vmatpush1.msra.mxu0 %v267
  %273 = vmatprep.subr.mxu0 0.0
  %274 = vmatpush1.msra.mxu0 0.0
  %275 = vmatprep.subr.mxu0 0.0
  %276 = vmatpush1.msra.mxu0 0.0
  %277 = vmatprep.subr.mxu0 0.0
  %278 = vmatpush1.msra.mxu0 0.0
  %279 = vmatprep.subr.mxu0 0.0
  %280 = vmatpush1.msra.mxu0 0.0
  %281 = vmatprep.subr.mxu0 0.0
  %282 = vmatpush1.msra.mxu0 0.0
  %283 = vmatprep.subr.mxu0 0.0
  %284 = vmatpush1.msra.mxu0 0.0
  %285 = vmatprep.subr.mxu0 0.0
  %286 = vmatpush1.msra.mxu0 0.0
  %287 = vmatprep.subr.mxu0 0.0
  %288 = vmatpush1.msra.mxu0 0.0
  %289 = vmatprep.subr.mxu0 0.0
  %290 = vmatpush1.msra.mxu0 0.0
  %291 = vmatprep.subr.mxu0 0.0
  %292 = vmatpush1.msra.mxu0 0.0
  %293 = vmatprep.subr.mxu0 0.0
  %294 = vmatpush1.msra.mxu0 0.0
  %295 = vmatprep.subr.mxu0 0.0
  %296 = vmatpush1.msra.mxu0 0.0
  %297 = vmatprep.subr.mxu0 0.0
  %298 = vmatpush1.msra.mxu0 0.0
  %299 = vmatprep.subr.mxu0 0.0
  %300 = vmatpush1.msra.mxu0 0.0
  %301 = vmatprep.subr.mxu0 0.0
  %302 = vmatpush1.msra.mxu0 0.0
  %303 = vmatprep.subr.mxu0 0.0
  %304 = vmatpush1.msra.mxu0 0.0
  %305 = vmatprep.subr.mxu0 0.0
  %306 = vmatpush1.msra.mxu0 0.0
  %307 = vmatprep.subr.mxu0 0.0
  %308 = vmatpush1.msra.mxu0 0.0
  %309 = vmatprep.subr.mxu0 0.0
  %310 = vmatpush1.msra.mxu0 0.0
  %311 = vmatprep.subr.mxu0 0.0
  %312 = vmatpush1.msra.mxu0 0.0
  %313 = vmatprep.subr.mxu0 0.0
  %314 = vmatpush1.msra.mxu0 0.0
  %315 = vmatprep.subr.mxu0 0.0
  %316 = vmatpush1.msra.mxu0 0.0
  %317 = vmatprep.subr.mxu0 0.0
  %318 = vmatpush1.msra.mxu0 0.0
  %319 = vmatprep.subr.mxu0 0.0
  %320 = vmatpush1.msra.mxu0 0.0
  %321 = vmatprep.subr.mxu0 0.0
  %322 = vmatpush1.msra.mxu0 0.0
  %323 = vmatprep.subr.mxu0 0.0
  %324 = vmatpush1.msra.mxu0 0.0
  %325 = vmatprep.subr.mxu0 0.0
  %326 = vmatpush1.msra.mxu0 0.0
  %327 = vmatprep.subr.mxu0 0.0
  %328 = vmatpush1.msra.mxu0 0.0
  %329 = vmatprep.subr.mxu0 0.0
  %330 = vmatpush1.msra.mxu0 0.0
  %331 = vmatprep.subr.mxu0 0.0
  %332 = vmatpush1.msra.mxu0 0.0
  %333 = vmatprep.subr.mxu0 0.0
  %334 = vmatpush1.msra.mxu0 0.0
  %335 = vmatprep.mubr.f32.mxu0 0.0
  %336 = vmatmul.mubr.f32.gmra.mrb[0].mxu0 %v269
  %v337 = vpop.f32.mrb[0].mxu0
  %v338 = vadd.f32 0.0, %v337
  %v339 = vpop.f32.mrb[0].mxu0
  %340 = vdwg.mxu0
  %v342 = vsel %vm112, %v106, 0
  %344 = vmatprep.subr.mxu0 0.0
  %345 = vmatpush1.msra.mxu0 %v266
  %346 = vmatprep.subr.mxu0 0.0
  %347 = vmatpush1.msra.mxu0 0.0
  %348 = vmatprep.subr.mxu0 0.0
  %349 = vmatpush1.msra.mxu0 0.0
  %350 = vmatprep.subr.mxu0 0.0
  %351 = vmatpush1.msra.mxu0 0.0
  %352 = vmatprep.subr.mxu0 0.0
  %353 = vmatpush1.msra.mxu0 0.0
  %354 = vmatprep.subr.mxu0 0.0
  %355 = vmatpush1.msra.mxu0 0.0
  %356 = vmatprep.subr.mxu0 0.0
  %357 = vmatpush1.msra.mxu0 0.0
  %358 = vmatprep.subr.mxu0 0.0
  %359 = vmatpush1.msra.mxu0 0.0
  %360 = vmatprep.subr.mxu0 0.0
  %361 = vmatpush1.msra.mxu0 0.0
  %362 = vmatprep.subr.mxu0 0.0
  %363 = vmatpush1.msra.mxu0 0.0
  %364 = vmatprep.subr.mxu0 0.0
  %365 = vmatpush1.msra.mxu0 0.0
  %366 = vmatprep.subr.mxu0 0.0
  %367 = vmatpush1.msra.mxu0 0.0
  %368 = vmatprep.subr.mxu0 0.0
  %369 = vmatpush1.msra.mxu0 0.0
  %370 = vmatprep.subr.mxu0 0.0
  %371 = vmatpush1.msra.mxu0 0.0
  %372 = vmatprep.subr.mxu0 0.0
  %373 = vmatpush1.msra.mxu0 0.0
  %374 = vmatprep.subr.mxu0 0.0
  %375 = vmatpush1.msra.mxu0 0.0
  %376 = vmatprep.subr.mxu0 0.0
  %377 = vmatpush1.msra.mxu0 0.0
  %378 = vmatprep.subr.mxu0 0.0
  %379 = vmatpush1.msra.mxu0 0.0
  %380 = vmatprep.subr.mxu0 0.0
  %381 = vmatpush1.msra.mxu0 0.0
  %382 = vmatprep.subr.mxu0 0.0
  %383 = vmatpush1.msra.mxu0 0.0
  %384 = vmatprep.subr.mxu0 0.0
  %385 = vmatpush1.msra.mxu0 0.0
  %386 = vmatprep.subr.mxu0 0.0
  %387 = vmatpush1.msra.mxu0 0.0
  %388 = vmatprep.subr.mxu0 0.0
  %389 = vmatpush1.msra.mxu0 0.0
  %390 = vmatprep.subr.mxu0 0.0
  %391 = vmatpush1.msra.mxu0 0.0
  %392 = vmatprep.subr.mxu0 0.0
  %393 = vmatpush1.msra.mxu0 0.0
  %394 = vmatprep.subr.mxu0 0.0
  %395 = vmatpush1.msra.mxu0 0.0
  %396 = vmatprep.subr.mxu0 0.0
  %397 = vmatpush1.msra.mxu0 0.0
  %398 = vmatprep.subr.mxu0 0.0
  %399 = vmatpush1.msra.mxu0 0.0
  %400 = vmatprep.subr.mxu0 0.0
  %401 = vmatpush1.msra.mxu0 0.0
  %402 = vmatprep.subr.mxu0 0.0
  %403 = vmatpush1.msra.mxu0 0.0
  %404 = vmatprep.subr.mxu0 0.0
  %405 = vmatpush1.msra.mxu0 0.0
  %406 = vmatprep.subr.mxu0 0.0
  %407 = vmatpush1.msra.mxu0 0.0
  %408 = vmatprep.mubr.f32.mxu0 0.0
  %409 = vmatmul.mubr.f32.gmra.mrb[0].mxu0 %v342
  %v410 = vpop.f32.mrb[0].mxu0
  %v411 = vadd.f32 %v338, %v410
  %v412 = vpop.f32.mrb[0].mxu0
  %413 = vdwg.mxu0
  %v414 = vlaneseq
  %v415 = vshrl.u32 %v414, 7
  %v416 = vsub.s32 3, %v415
  %v417 = vrot.slane %v25, %v416
  %v418 = vadd.f32 %v411, %v417
  %v419 = vmax.f32 %v418, 0.0
  %v420 = vxor.u32 %v25, 2147483648
  %v421 = vmul.f32 %v420, 1.442695
  %v422 = vpow.pop %v421
  %v423 = vadd.f32 %v422, 1.0
  %v424 = vrcp.pop %v423
  %v425 = vmul.f32 1.0, %v424
  %v426 = vlaneseq
  %v427 = vand.u32 %v426, 127
  %vm428 = vcmp.lt.s32.totalorder %v427, 32
  %430 = vset.pattern.permute.xlu0 1
  %431 = vperm.xlu0 %430, %v425
  %v432 = vpop.permute.xlu0 %431
  %434 = vset.pattern.permute.xlu0 2
  %435 = vperm.xlu0 %434, %v425
  %v436 = vpop.permute.xlu0 %435
  %v438 = vsel %vm428, %v432, %v436
  %v439 = vlaneseq
  %v440 = vshrl.u32 %v439, 7
  %v441 = vsub.s32 7, %v440
  %v442 = vrot.slane %v438, %v441
  %v443 = vmul.f32 %v442, %v419
  %vm444 = vcmask 523264
  %v445 = vsel %vm444, %v443, 0.0
  %v446 = vrot.slane %v445, 4
  %v447 = vadd.f32 %v445, %v446
  %v448 = vrot.slane %v447, 2
  %v449 = vadd.f32 %v447, %v448
  %v450 = vrot.slane %v449, 1
  %v451 = vadd.f32 %v449, %v450
  %v452 = vrcp.pop 8.0
  %v453 = vmul.f32 %v451, %v452
  %v454 = vsub.f32 %v443, %v453
  %v455 = vmul.f32 %v454, %v454
  %v456 = vsel %vm444, %v455, 0.0
  %v457 = vrot.slane %v456, 4
  %v458 = vadd.f32 %v456, %v457
  %v459 = vrot.slane %v458, 2
  %v460 = vadd.f32 %v458, %v459
  %v461 = vrot.slane %v460, 1
  %v462 = vadd.f32 %v460, %v461
  %v463 = vmul.f32 %v462, %v452
  %v464 = vadd.f32 %v463, 1e-05
  %v465 = vrsqrt.pop %v464
  %v466 = vmul.f32 %v454, %v465
  %v467 = vlaneseq
  %v468 = vshrl.u32 %v467, 7
  %v469 = vsub.s32 4, %v468
  %v470 = vrot.slane %v25, %v469
  %v471 = vmul.f32 %v466, %v470
  %v472 = vlaneseq
  %v473 = vshrl.u32 %v472, 7
  %v474 = vsub.s32 5, %v473
  %v475 = vrot.slane %v25, %v474
  %v476 = vadd.f32 %v471, %v475
  %v477 = vlaneseq
  %v478 = vshrl.u32 %v477, 7
  %v479 = vsub.s32 6, %v478
  %v480 = vrot.slane %v25, %v479
  %v481 = vmul.f32 %v476, %v480
  %v482 = vsel %vm444, %v481, 0.0
  %483 = vadd.xlane.f32.xlu0 %v482
  %v484 = vpop.xlane.xlu0 %483
  %v485 = vlaneseq
  %v486 = vshrl.u32 %v485, 7
  %v487 = vsub.s32 7, %v486
  %v488 = vrot.slane %v25, %v487
  %v489 = vadd.f32 %v484, %v488
  %v490 = vmax.f32 %v489, 0.0
  %492 = vset.pattern.permute.xlu0 0
  %493 = vperm.xlu0 %492, %v490
  %v494 = vpop.permute.xlu0 %493
  %496 = vst [vmem:[%s6] sm:$0xff] %v494
  // Predicated region
  $region26: #{netgp_forward.1} parent=0 // pred_check
    _
  $region27: #{netgp_forward.1} parent=0 // pred_check_branch
    %498 = sbr.rel (0) target = $region29
  $region28: #{netgp_forward.1} parent=0 // pred_region
    _
  $region29: #{netgp_forward.1} parent=0 // pred_fallthru
    _
  // Predicated region
  $region30: #{netgp_forward.1} parent=0 // pred_check
    _
  $region31: #{netgp_forward.1} parent=0 // pred_check_branch
    %500 = sbr.rel (0) target = $region33
  $region32: #{netgp_forward.1} parent=0 // pred_region
    _
  $region33: #{netgp_forward.1} parent=0 // pred_fallthru
    _

</llo_original>
